<compile_context>
chip_gen: v7x
topology: tpu7x:2x2x1
jax: 0.10.0
libtpu: 0.0.40
codegen_flags: <defaults>
</compile_context>

<pallas_src>
import functools
import math

import jax
import jax.numpy as jnp
from jax.experimental import pallas as pl
from jax.experimental.pallas import tpu as pltpu

# The 9 fixed index combinations from the PyTorch forward.
COMBOS = (
    (0, 1, 3, 4), (0, 1, 3, 5), (0, 1, 4, 5),
    (0, 2, 3, 4), (0, 2, 3, 5), (0, 2, 4, 5),
    (1, 2, 3, 4), (1, 2, 3, 5), (1, 2, 4, 5),
)


def _merged_pieces():
    """(out_elem_start, in_elem_start, run_length) with contiguous runs merged.

    36 single-element copies collapse to 20 runs (max width 4)."""
    pieces = []
    out_pos = 0
    for combo in COMBOS:
        i = 0
        while i < 4:
            j = i
            while j + 1 < 4 and combo[j + 1] == combo[j] + 1:
                j += 1
            pieces.append((out_pos + i, combo[i], j - i + 1))
            i = j + 1
        out_pos += 4
    return tuple(pieces)


_PIECES = _merged_pieces()  # 20 (out_start, in_start, length) runs


def _choise_kernel(x_ref, o_ref, *, d, pieces):
    # x_ref: (tile_rows, 6*d)   lane-collapsed input tile
    # o_ref: (tile_rows, 36*d)  lane-collapsed output tile
    # Direct ref->ref lane-slab copies: no full-tile temp, single dense write
    # stream per output slab; the 6*d input row is read once per run.
    for out_e, in_e, length in pieces:
        o_ref[:, out_e * d:(out_e + length) * d] = (
            x_ref[:, in_e * d:(in_e + length) * d])


def _round_up(x, m):
    return ((x + m - 1) // m) * m


def _round_down(x, m):
    return (x // m) * m


def _pick_tile_rows(rows, d, itemsize,
                    target_out_block_bytes=4 << 20, min_steps=8):
    """Row-tile size: multiple of sublane granularity, ~4 MiB output block,
    and small enough that the grid has >= min_steps steps when possible."""
    gran = 8 * max(1, 4 // itemsize)          # 8 (f32) / 16 (bf16) / 32 (i8)
    if rows <= gran:
        return rows                            # block == full dim -> legal
    row_out_bytes = 36 * d * itemsize
    by_bytes = max(gran, _round_down(
        target_out_block_bytes // max(1, row_out_bytes), gran))
    by_steps = max(gran, _round_up(math.ceil(rows / min_steps), gran))
    return min(by_bytes, by_steps)


def get_choise_pallas(x):
    b, s, n, m, d = x.shape
    assert m == 6
    rows = b * s * n
    # Contiguous reshape: (b,s,n,6,d) -> (rows, 6*d). Pure layout view.
    x2 = x.reshape(rows, 6 * d)

    tile_rows = _pick_tile_rows(rows, d, x.dtype.itemsize)
    grid = (pl.cdiv(rows, tile_rows),)         # ragged last block is OK

    # Pure memory-bound: 6*d read + 36*d written per row.
    bytes_accessed = rows * 42 * d * x.dtype.itemsize

    out2 = pl.pallas_call(
        functools.partial(_choise_kernel, d=d, pieces=_PIECES),
        out_shape=jax.ShapeDtypeStruct((rows, 36 * d), x.dtype),
        grid=grid,
        in_specs=[
            # Lane dims equal the full array dims; row dim is a multiple of
            # the sublane granularity -> (8,128) rule satisfied.
            pl.BlockSpec((tile_rows, 6 * d), lambda i: (i, 0)),
        ],
        out_specs=pl.BlockSpec((tile_rows, 36 * d), lambda i: (i, 0)),
        compiler_params=pltpu.CompilerParams(
            dimension_semantics=("parallel",),
        ),
        cost_estimate=pl.CostEstimate(
            flops=0, transcendentals=0, bytes_accessed=bytes_accessed),
    )(x2)

    # Contiguous reshape back to the module's output layout.
    return out2.reshape(b, s, n, 9, 4, d)


def get_choise_ref(x):
    # Pure-JAX reference mirroring the PyTorch semantics.
    sels = [x[:, :, :, jnp.array(c), :] for c in COMBOS]
    return jnp.stack(sels, axis=3)


if __name__ == "__main__":
    key = jax.random.PRNGKey(0)
    b, s, n, m, d = 2, 8, 4, 6, 8
    x = jax.random.normal(key, (b, s, n, m, d), dtype=jnp.float32)

    out = get_choise_pallas(x)
    out = jax.block_until_ready(out)

    ref = get_choise_ref(x)
    assert out.shape == (b, s, n, 9, 4, d), out.shape
    assert jnp.allclose(out, ref), "mismatch vs reference"

    print("KERNEL_OK")
</pallas_src>

<mosaic_0001>
module attributes {stable_mosaic.version = 11 : i64} {
  func.func @_choise_kernel(%arg0: i32, %arg1: memref<8x48xf32, #tpu.memory_space<vmem>>, %arg2: memref<8x288xf32, #tpu.memory_space<vmem>>) attributes {dimension_semantics = [#tpu.dimension_semantics<parallel>], iteration_bounds = array<i64: 8>, scalar_prefetch = 0 : i64, scratch_operands = 0 : i64, tpu.core_type = #tpu.core_type<tc>, window_params = [{transform_indices = @transform_0, window_bounds = array<i64: 8, 48>}, {transform_indices = @transform_1, window_bounds = array<i64: 8, 288>}]} {
    %c0 = arith.constant 0 : index
    %c0_0 = arith.constant 0 : index
    %0 = vector.load %arg1[%c0, %c0_0] : memref<8x48xf32, #tpu.memory_space<vmem>>, vector<8x16xf32>
    %c0_1 = arith.constant 0 : index
    %c0_2 = arith.constant 0 : index
    %1 = vector.load %arg2[%c0_1, %c0_2] : memref<8x288xf32, #tpu.memory_space<vmem>>, vector<8x16xf32>
    tpu.vector_store %arg2[%c0_1, %c0_2], %0 {strides = array<i32>} : memref<8x288xf32, #tpu.memory_space<vmem>>, vector<8x16xf32>,
    %c0_3 = arith.constant 0 : index
    %c24 = arith.constant 24 : index
    %2 = vector.load %arg1[%c0_3, %c24] : memref<8x48xf32, #tpu.memory_space<vmem>>, vector<8x16xf32>
    %c0_4 = arith.constant 0 : index
    %c16 = arith.constant 16 : index
    %3 = vector.load %arg2[%c0_4, %c16] : memref<8x288xf32, #tpu.memory_space<vmem>>, vector<8x16xf32>
    tpu.vector_store %arg2[%c0_4, %c16], %2 {strides = array<i32>} : memref<8x288xf32, #tpu.memory_space<vmem>>, vector<8x16xf32>,
    %c0_5 = arith.constant 0 : index
    %c0_6 = arith.constant 0 : index
    %4 = vector.load %arg1[%c0_5, %c0_6] : memref<8x48xf32, #tpu.memory_space<vmem>>, vector<8x16xf32>
    %c0_7 = arith.constant 0 : index
    %c32 = arith.constant 32 : index
    %5 = vector.load %arg2[%c0_7, %c32] : memref<8x288xf32, #tpu.memory_space<vmem>>, vector<8x16xf32>
    tpu.vector_store %arg2[%c0_7, %c32], %4 {strides = array<i32>} : memref<8x288xf32, #tpu.memory_space<vmem>>, vector<8x16xf32>,
    %c0_8 = arith.constant 0 : index
    %c24_9 = arith.constant 24 : index
    %6 = vector.load %arg1[%c0_8, %c24_9] : memref<8x48xf32, #tpu.memory_space<vmem>>, vector<8x8xf32>
    %c0_10 = arith.constant 0 : index
    %c48 = arith.constant 48 : index
    %7 = vector.load %arg2[%c0_10, %c48] : memref<8x288xf32, #tpu.memory_space<vmem>>, vector<8x8xf32>
    tpu.vector_store %arg2[%c0_10, %c48], %6 {strides = array<i32>} : memref<8x288xf32, #tpu.memory_space<vmem>>, vector<8x8xf32>,
    %c0_11 = arith.constant 0 : index
    %c40 = arith.constant 40 : index
    %8 = vector.load %arg1[%c0_11, %c40] : memref<8x48xf32, #tpu.memory_space<vmem>>, vector<8x8xf32>
    %c0_12 = arith.constant 0 : index
    %c56 = arith.constant 56 : index
    %9 = vector.load %arg2[%c0_12, %c56] : memref<8x288xf32, #tpu.memory_space<vmem>>, vector<8x8xf32>
    tpu.vector_store %arg2[%c0_12, %c56], %8 {strides = array<i32>} : memref<8x288xf32, #tpu.memory_space<vmem>>, vector<8x8xf32>,
    %c0_13 = arith.constant 0 : index
    %c0_14 = arith.constant 0 : index
    %10 = vector.load %arg1[%c0_13, %c0_14] : memref<8x48xf32, #tpu.memory_space<vmem>>, vector<8x16xf32>
    %c0_15 = arith.constant 0 : index
    %c64 = arith.constant 64 : index
    %11 = vector.load %arg2[%c0_15, %c64] : memref<8x288xf32, #tpu.memory_space<vmem>>, vector<8x16xf32>
    tpu.vector_store %arg2[%c0_15, %c64], %10 {strides = array<i32>} : memref<8x288xf32, #tpu.memory_space<vmem>>, vector<8x16xf32>,
    %c0_16 = arith.constant 0 : index
    %c32_17 = arith.constant 32 : index
    %12 = vector.load %arg1[%c0_16, %c32_17] : memref<8x48xf32, #tpu.memory_space<vmem>>, vector<8x16xf32>
    %c0_18 = arith.constant 0 : index
    %c80 = arith.constant 80 : index
    %13 = vector.load %arg2[%c0_18, %c80] : memref<8x288xf32, #tpu.memory_space<vmem>>, vector<8x16xf32>
    tpu.vector_store %arg2[%c0_18, %c80], %12 {strides = array<i32>} : memref<8x288xf32, #tpu.memory_space<vmem>>, vector<8x16xf32>,
    %c0_19 = arith.constant 0 : index
    %c0_20 = arith.constant 0 : index
    %14 = vector.load %arg1[%c0_19, %c0_20] : memref<8x48xf32, #tpu.memory_space<vmem>>, vector<8x8xf32>
    %c0_21 = arith.constant 0 : index
    %c96 = arith.constant 96 : index
    %15 = vector.load %arg2[%c0_21, %c96] : memref<8x288xf32, #tpu.memory_space<vmem>>, vector<8x8xf32>
    tpu.vector_store %arg2[%c0_21, %c96], %14 {strides = array<i32>} : memref<8x288xf32, #tpu.memory_space<vmem>>, vector<8x8xf32>,
    %c0_22 = arith.constant 0 : index
    %c16_23 = arith.constant 16 : index
    %16 = vector.load %arg1[%c0_22, %c16_23] : memref<8x48xf32, #tpu.memory_space<vmem>>, vector<8x24xf32>
    %c0_24 = arith.constant 0 : index
    %c104 = arith.constant 104 : index
    %17 = vector.load %arg2[%c0_24, %c104] : memref<8x288xf32, #tpu.memory_space<vmem>>, vector<8x24xf32>
    tpu.vector_store %arg2[%c0_24, %c104], %16 {strides = array<i32>} : memref<8x288xf32, #tpu.memory_space<vmem>>, vector<8x24xf32>,
    %c0_25 = arith.constant 0 : index
    %c0_26 = arith.constant 0 : index
    %18 = vector.load %arg1[%c0_25, %c0_26] : memref<8x48xf32, #tpu.memory_space<vmem>>, vector<8x8xf32>
    %c0_27 = arith.constant 0 : index
    %c128 = arith.constant 128 : index
    %19 = vector.load %arg2[%c0_27, %c128] : memref<8x288xf32, #tpu.memory_space<vmem>>, vector<8x8xf32>
    tpu.vector_store %arg2[%c0_27, %c128], %18 {strides = array<i32>} : memref<8x288xf32, #tpu.memory_space<vmem>>, vector<8x8xf32>,
    %c0_28 = arith.constant 0 : index
    %c16_29 = arith.constant 16 : index
    %20 = vector.load %arg1[%c0_28, %c16_29] : memref<8x48xf32, #tpu.memory_space<vmem>>, vector<8x16xf32>
    %c0_30 = arith.constant 0 : index
    %c136 = arith.constant 136 : index
    %21 = vector.load %arg2[%c0_30, %c136] : memref<8x288xf32, #tpu.memory_space<vmem>>, vector<8x16xf32>
    tpu.vector_store %arg2[%c0_30, %c136], %20 {strides = array<i32>} : memref<8x288xf32, #tpu.memory_space<vmem>>, vector<8x16xf32>,
    %c0_31 = arith.constant 0 : index
    %c40_32 = arith.constant 40 : index
    %22 = vector.load %arg1[%c0_31, %c40_32] : memref<8x48xf32, #tpu.memory_space<vmem>>, vector<8x8xf32>
    %c0_33 = arith.constant 0 : index
    %c152 = arith.constant 152 : index
    %23 = vector.load %arg2[%c0_33, %c152] : memref<8x288xf32, #tpu.memory_space<vmem>>, vector<8x8xf32>
    tpu.vector_store %arg2[%c0_33, %c152], %22 {strides = array<i32>} : memref<8x288xf32, #tpu.memory_space<vmem>>, vector<8x8xf32>,
    %c0_34 = arith.constant 0 : index
    %c0_35 = arith.constant 0 : index
    %24 = vector.load %arg1[%c0_34, %c0_35] : memref<8x48xf32, #tpu.memory_space<vmem>>, vector<8x8xf32>
    %c0_36 = arith.constant 0 : index
    %c160 = arith.constant 160 : index
    %25 = vector.load %arg2[%c0_36, %c160] : memref<8x288xf32, #tpu.memory_space<vmem>>, vector<8x8xf32>
    tpu.vector_store %arg2[%c0_36, %c160], %24 {strides = array<i32>} : memref<8x288xf32, #tpu.memory_space<vmem>>, vector<8x8xf32>,
    %c0_37 = arith.constant 0 : index
    %c16_38 = arith.constant 16 : index
    %26 = vector.load %arg1[%c0_37, %c16_38] : memref<8x48xf32, #tpu.memory_space<vmem>>, vector<8x8xf32>
    %c0_39 = arith.constant 0 : index
    %c168 = arith.constant 168 : index
    %27 = vector.load %arg2[%c0_39, %c168] : memref<8x288xf32, #tpu.memory_space<vmem>>, vector<8x8xf32>
    tpu.vector_store %arg2[%c0_39, %c168], %26 {strides = array<i32>} : memref<8x288xf32, #tpu.memory_space<vmem>>, vector<8x8xf32>,
    %c0_40 = arith.constant 0 : index
    %c32_41 = arith.constant 32 : index
    %28 = vector.load %arg1[%c0_40, %c32_41] : memref<8x48xf32, #tpu.memory_space<vmem>>, vector<8x16xf32>
    %c0_42 = arith.constant 0 : index
    %c176 = arith.constant 176 : index
    %29 = vector.load %arg2[%c0_42, %c176] : memref<8x288xf32, #tpu.memory_space<vmem>>, vector<8x16xf32>
    tpu.vector_store %arg2[%c0_42, %c176], %28 {strides = array<i32>} : memref<8x288xf32, #tpu.memory_space<vmem>>, vector<8x16xf32>,
    %c0_43 = arith.constant 0 : index
    %c8 = arith.constant 8 : index
    %30 = vector.load %arg1[%c0_43, %c8] : memref<8x48xf32, #tpu.memory_space<vmem>>, vector<8x32xf32>
    %c0_44 = arith.constant 0 : index
    %c192 = arith.constant 192 : index
    %31 = vector.load %arg2[%c0_44, %c192] : memref<8x288xf32, #tpu.memory_space<vmem>>, vector<8x32xf32>
    tpu.vector_store %arg2[%c0_44, %c192], %30 {strides = array<i32>} : memref<8x288xf32, #tpu.memory_space<vmem>>, vector<8x32xf32>,
    %c0_45 = arith.constant 0 : index
    %c8_46 = arith.constant 8 : index
    %32 = vector.load %arg1[%c0_45, %c8_46] : memref<8x48xf32, #tpu.memory_space<vmem>>, vector<8x24xf32>
    %c0_47 = arith.constant 0 : index
    %c224 = arith.constant 224 : index
    %33 = vector.load %arg2[%c0_47, %c224] : memref<8x288xf32, #tpu.memory_space<vmem>>, vector<8x24xf32>
    tpu.vector_store %arg2[%c0_47, %c224], %32 {strides = array<i32>} : memref<8x288xf32, #tpu.memory_space<vmem>>, vector<8x24xf32>,
    %c0_48 = arith.constant 0 : index
    %c40_49 = arith.constant 40 : index
    %34 = vector.load %arg1[%c0_48, %c40_49] : memref<8x48xf32, #tpu.memory_space<vmem>>, vector<8x8xf32>
    %c0_50 = arith.constant 0 : index
    %c248 = arith.constant 248 : index
    %35 = vector.load %arg2[%c0_50, %c248] : memref<8x288xf32, #tpu.memory_space<vmem>>, vector<8x8xf32>
    tpu.vector_store %arg2[%c0_50, %c248], %34 {strides = array<i32>} : memref<8x288xf32, #tpu.memory_space<vmem>>, vector<8x8xf32>,
    %c0_51 = arith.constant 0 : index
    %c8_52 = arith.constant 8 : index
    %36 = vector.load %arg1[%c0_51, %c8_52] : memref<8x48xf32, #tpu.memory_space<vmem>>, vector<8x16xf32>
    %c0_53 = arith.constant 0 : index
    %c256 = arith.constant 256 : index
    %37 = vector.load %arg2[%c0_53, %c256] : memref<8x288xf32, #tpu.memory_space<vmem>>, vector<8x16xf32>
    tpu.vector_store %arg2[%c0_53, %c256], %36 {strides = array<i32>} : memref<8x288xf32, #tpu.memory_space<vmem>>, vector<8x16xf32>,
    %c0_54 = arith.constant 0 : index
    %c32_55 = arith.constant 32 : index
    %38 = vector.load %arg1[%c0_54, %c32_55] : memref<8x48xf32, #tpu.memory_space<vmem>>, vector<8x16xf32>
    %c0_56 = arith.constant 0 : index
    %c272 = arith.constant 272 : index
    %39 = vector.load %arg2[%c0_56, %c272] : memref<8x288xf32, #tpu.memory_space<vmem>>, vector<8x16xf32>
    tpu.vector_store %arg2[%c0_56, %c272], %38 {strides = array<i32>} : memref<8x288xf32, #tpu.memory_space<vmem>>, vector<8x16xf32>,
    return
  }
  func.func @transform_0(%arg0: i32) -> (i32, i32) {
    %c0_i32 = arith.constant 0 : i32
    %c0_i32_0 = arith.constant 0 : i32
    return %arg0, %c0_i32 : i32, i32
  }
  func.func @transform_1(%arg0: i32) -> (i32, i32) {
    %c0_i32 = arith.constant 0 : i32
    %c0_i32_0 = arith.constant 0 : i32
    return %arg0, %c0_i32 : i32, i32
  }
}

</mosaic_0001>

<llo_original>
// kernel: tpu_custom_call.1
$region0: #{tpu_custom_call.1}
  #allocation0 [shape = 'u32[]', space=smem, size = 0x4, offset = 0x4, fixed_abs, tag = 'smem constant byte address 0x4 - core index']
  #allocation1 [shape = 'u32[144,128]{1,0:T(1,128)}', space=vmem, size = 0x12000, scoped, tag = 'internal scratch']
  %s0 = inlined_call_operand.vmem [shape: f32[64,48], index: 0, kind: input, shape index: {}]
  %s1 = inlined_call_operand.hbm [shape: f32[64,288], index: 1, kind: output, shape index: {}]
  %s2 = sld [smem:[#allocation0]]
  $region37: #{tpu_custom_call.1} parent=0
    _
  %s4 = ssub.s32 1, %s2
  %s5 = scalar_select 0, %s4, %s2
  $region1: #{tpu_custom_call.1} parent=0
    #allocation2 [shape = 'u8[24576]{0}', space=vmem, size = 0x6000, scoped, tag = 'output window, operand 0']
    #allocation3 [shape = 's32[2]{0}', space=sflag, size = 0x8, scoped, tag = 'scoped memory for tpu_custom_call.1']
    %6 = vsyncpa [#allocation3], 0
    %s7 = scalar_lea.sflag [#allocation3], 1
    %8 = vsyncpa %s7, 0
    loop: start=0, step=1, limit=10
    $region2: #{tpu_custom_call.1} parent=1 // loop_pre_header
      _
    $region3: #{tpu_custom_call.1} parent=1 // loop_header
      %s10 = sphi 0, %s14
      %p11 = scmp.ge.s32.totalorder %s10, 10
      %s20 = sphi 0, %s22
      %s23 = sphi 0, %s20
      %s24 = sphi 0, %s23
      %s40 = sphi 0, %s24
      %s46 = sphi 0, %s48
      %s49 = sphi 0, %s46
      %s50 = sphi 0, %s49
      %s66 = sphi 0, %s50
    $region4: #{tpu_custom_call.1} parent=1 // loop_header_branch
      %13 = sbr.rel (%p11) target = $region8
    $region5: #{tpu_custom_call.1} parent=1 // loop_body
      %s15 = ssub.s32 %s10, 1
      %s16 = ssub.s32 %s10, 2
      %s17 = sadd.s32 %s10, 1
      %s18 = ssub.s32 %s10, %s17
      %p19 = scmp.eq.s32.totalorder %s18, 0
      %s21 = sadd.s32 %s20, 1
      %s22 = scalar_select %p19, %s20, %s21
      %p25 = pneg %p19
      %p26 = scmp.eq.s32.totalorder %s10, 7
      %p27 = por %p25, %p26
      %p28 = scmp.ne.s32.totalorder %s20, %s23
      %p29 = scmp.eq.s32.totalorder %s10, 0
      %p30 = por %p28, %p29
      %p31 = scmp.ne.s32.totalorder %s20, %s23
      %p32 = scmp.eq.s32.totalorder %s15, 7
      %p33 = por %p31, %p32
      %p34 = scmp.ne.s32.totalorder %s23, %s24
      %p35 = scmp.eq.s32.totalorder %s15, 0
      %p36 = por %p34, %p35
      %p37 = scmp.ne.s32.totalorder %s23, %s24
      %p38 = scmp.eq.s32.totalorder %s16, 7
      %p39 = por %p37, %p38
      %p41 = scmp.ne.s32.totalorder %s24, %s40
      %p42 = scmp.eq.s32.totalorder %s16, 0
      %p43 = por %p41, %p42
      %s44 = ssub.s32 %s10, %s17
      %p45 = scmp.eq.s32.totalorder %s44, 0
      %s47 = sadd.s32 %s46, 1
      %s48 = scalar_select %p45, %s46, %s47
      %p51 = pneg %p45
      %p52 = scmp.eq.s32.totalorder %s10, 7
      %p53 = por %p51, %p52
      %p54 = scmp.ne.s32.totalorder %s46, %s49
      %p55 = scmp.eq.s32.totalorder %s10, 0
      %p56 = por %p54, %p55
      %p57 = scmp.ne.s32.totalorder %s46, %s49
      %p58 = scmp.eq.s32.totalorder %s15, 7
      %p59 = por %p57, %p58
      %p60 = scmp.ne.s32.totalorder %s49, %s50
      %p61 = scmp.eq.s32.totalorder %s15, 0
      %p62 = por %p60, %p61
      %p63 = scmp.ne.s32.totalorder %s49, %s50
      %p64 = scmp.eq.s32.totalorder %s16, 7
      %p65 = por %p63, %p64
      %p67 = scmp.ne.s32.totalorder %s50, %s66
      %p68 = scmp.eq.s32.totalorder %s16, 0
      %p69 = por %p67, %p68
      %p70 = scmp.le.s32.totalorder 1, %s10
      %p71 = scmp.lt.s32.totalorder %s10, 9
      %p72 = pnand %p70, %p71
      %p73 = pneg %p72
      // Predicated region
      $region9: #{tpu_custom_call.1} parent=5 // pred_check
        _
      $region10: #{tpu_custom_call.1} parent=5 // pred_check_branch
        %75 = sbr.rel (%p72) target = $region12
      $region11: #{tpu_custom_call.1} parent=5 // pred_region
        %s76 = ssub.s32 %s10, 1
      $region12: #{tpu_custom_call.1} parent=5 // pred_fallthru
        _
      %p77 = scmp.lt.s32.totalorder %s10, 8
      // Predicated region
      $region13: #{tpu_custom_call.1} parent=5 // pred_check
        %p78 = pneg %p77
      $region14: #{tpu_custom_call.1} parent=5 // pred_check_branch
        %80 = sbr.rel (%p78) target = $region16
      $region15: #{tpu_custom_call.1} parent=5 // pred_region
        // Predicated region
        $region17: #{tpu_custom_call.1} parent=15 // pred_check
          %p81 = pneg %p30
        $region18: #{tpu_custom_call.1} parent=15 // pred_check_branch
          %83 = sbr.rel (%p81) target = $region20
        $region19: #{tpu_custom_call.1} parent=15 // pred_region
          %p84 = scmp.lt.s32.totalorder %s10, 7
          %s85 = scalar_select %p84, %s10, 7
          %s86 = smul.addr %s85, 8
          %s87 = scalar_lea.vmem %s0, %s86
        $region20: #{tpu_custom_call.1} parent=15 // pred_fallthru
          _
      $region16: #{tpu_custom_call.1} parent=5 // pred_fallthru
        _
      %p88 = scmp.le.s32.totalorder 1, %s10
      %p89 = scmp.lt.s32.totalorder %s10, 9
      %p90 = pnand %p88, %p89
      %p91 = pneg %p90
      // Predicated region
      $region21: #{tpu_custom_call.1} parent=5 // pred_check
        _
      $region22: #{tpu_custom_call.1} parent=5 // pred_check_branch
        %93 = sbr.rel (%p90) target = $region24
      $region23: #{tpu_custom_call.1} parent=5 // pred_region
        %s94 = ssub.s32 %s10, 1
        %p95 = scmp.lt.s32.totalorder %s15, 7
        %s96 = scalar_select %p95, %s15, 7
        %s97 = smul.addr %s96, 8
        %s98 = scalar_lea.vmem %s0, %s97
        %p99 = pneg %p36
        %p100 = pneg %p33
        %p101 = pneg %p62
        %p102 = pneg %p59
        %s103 = sand.u32 %s49, 1
        %s104 = scalar_lea.sflag [#allocation3], %s103
        %s105 = sand.u32 %s49, 1
        %s106 = smul.addr %s105, 24
        %s107 = scalar_lea.vmem [#allocation2], %s106
        %p108 = scmp.lt.s32.totalorder %s15, 7
        %s109 = scalar_select %p108, %s15, 7
        %s110 = smul.addr %s109, 8
        %s111 = scalar_lea.vmem %s0, %s110
        %v112 = vld [vmem:[%s111] sm:$0xff]
        %vm113 = vcmask 130048
        %114 = vst.msk [vmem:[%s107] sm:$0xff] %vm113, %v112
        %v115 = vld [vmem:[%s111] sm:$0xff]
        %117 = vrot.lane.b32.xlu0 %v115, 120
        %v118 = vpop.permute.xlu0 %117
        %vm120 = vcmask 261248
        %121 = vst.msk [vmem:[%s107] sm:$0xff] %vm120, %v118
        %v122 = vld [vmem:[%s111] sm:$0xff]
        %124 = vrot.lane.b32.xlu0 %v122, 32
        %v125 = vpop.permute.xlu0 %124
        %vm127 = vcmask 392448
        %128 = vst.msk [vmem:[%s107] sm:$0xff] %vm127, %v125
        %v129 = vld [vmem:[%s111] sm:$0xff]
        %131 = vrot.lane.b32.xlu0 %v129, 24
        %v132 = vpop.permute.xlu0 %131
        %vm134 = vcmask 458112
        %135 = vst.msk [vmem:[%s107] sm:$0xff] %vm134, %v132
        %v136 = vld [vmem:[%s111] sm:$0xff]
        %138 = vrot.lane.b32.xlu0 %v136, 16
        %v139 = vpop.permute.xlu0 %138
        %vm141 = vcmask 523712
        %142 = vst.msk [vmem:[%s107] sm:$0xff] %vm141, %v139
        %v143 = vld [vmem:[%s111] sm:$0xff]
        %145 = vrot.lane.b32.xlu0 %v143, 64
        %v146 = vpop.permute.xlu0 %145
        %vm148 = vcmask 654848
        %149 = vst.msk [vmem:[%s107] sm:$0xff] %vm148, %v146
        %v150 = vld [vmem:[%s111] sm:$0xff]
        %152 = vrot.lane.b32.xlu0 %v150, 48
        %v153 = vpop.permute.xlu0 %152
        %vm155 = vcmask 786048
        %156 = vst.msk [vmem:[%s107] sm:$0xff] %vm155, %v153
        %v157 = vld [vmem:[%s111] sm:$0xff]
        %159 = vrot.lane.b32.xlu0 %v157, 96
        %v160 = vpop.permute.xlu0 %159
        %vm162 = vcmask 851712
        %163 = vst.msk [vmem:[%s107] sm:$0xff] %vm162, %v160
        %v164 = vld [vmem:[%s111] sm:$0xff]
        %166 = vrot.lane.b32.xlu0 %v164, 88
        %v167 = vpop.permute.xlu0 %166
        %vm169 = vcmask 1048384
        %170 = vst.msk [vmem:[%s107] sm:$0xff] %vm169, %v167
        %v171 = vld [vmem:[%s111] sm:$0xff]
        %vm172 = vcmask 64512
        %173 = vst.msk [vmem:[%s107 + $0x8] sm:$0xff] %vm172, %v171
        %v174 = vld [vmem:[%s111] sm:$0xff]
        %176 = vrot.lane.b32.xlu0 %v174, 120
        %v177 = vpop.permute.xlu0 %176
        %vm179 = vcmask 195648
        %180 = vst.msk [vmem:[%s107 + $0x8] sm:$0xff] %vm179, %v177
        %v181 = vld [vmem:[%s111] sm:$0xff]
        %183 = vrot.lane.b32.xlu0 %v181, 112
        %v184 = vpop.permute.xlu0 %183
        %vm186 = vcmask 261312
        %187 = vst.msk [vmem:[%s107 + $0x8] sm:$0xff] %vm186, %v184
        %v188 = vld [vmem:[%s111] sm:$0xff]
        %190 = vrot.lane.b32.xlu0 %v188, 32
        %v191 = vpop.permute.xlu0 %190
        %vm193 = vcmask 326912
        %194 = vst.msk [vmem:[%s107 + $0x8] sm:$0xff] %vm193, %v191
        %v195 = vld [vmem:[%s111] sm:$0xff]
        %197 = vrot.lane.b32.xlu0 %v195, 24
        %v198 = vpop.permute.xlu0 %197
        %vm200 = vcmask 392512
        %201 = vst.msk [vmem:[%s107 + $0x8] sm:$0xff] %vm200, %v198
        %v202 = vld [vmem:[%s111] sm:$0xff]
        %204 = vrot.lane.b32.xlu0 %v202, 16
        %v205 = vpop.permute.xlu0 %204
        %vm207 = vcmask 523648
        %208 = vst.msk [vmem:[%s107 + $0x8] sm:$0xff] %vm207, %v205
        %v209 = vld [vmem:[%s111] sm:$0xff]
        %211 = vrot.lane.b32.xlu0 %v209, 56
        %v212 = vpop.permute.xlu0 %211
        %vm214 = vcmask 785920
        %215 = vst.msk [vmem:[%s107 + $0x8] sm:$0xff] %vm214, %v212
        %v216 = vld [vmem:[%s111] sm:$0xff]
        %218 = vrot.lane.b32.xlu0 %v216, 88
        %v219 = vpop.permute.xlu0 %218
        %vm221 = vcmask 982784
        %222 = vst.msk [vmem:[%s107 + $0x8] sm:$0xff] %vm221, %v219
        %v223 = vld [vmem:[%s111] sm:$0xff]
        %225 = vrot.lane.b32.xlu0 %v223, 80
        %v226 = vpop.permute.xlu0 %225
        %vm228 = vcmask 1048512
        %229 = vst.msk [vmem:[%s107 + $0x8] sm:$0xff] %vm228, %v226
        %v230 = vld [vmem:[%s111] sm:$0xff]
        %232 = vrot.lane.b32.xlu0 %v230, 120
        %v233 = vpop.permute.xlu0 %232
        %235 = vst.msk [vmem:[%s107 + $0x10] sm:$0xff] %vm113, %v233
        %v236 = vld [vmem:[%s111] sm:$0xff]
        %238 = vrot.lane.b32.xlu0 %v236, 112
        %v239 = vpop.permute.xlu0 %238
        %241 = vst.msk [vmem:[%s107 + $0x10] sm:$0xff] %vm120, %v239
        %s242 = sand.u32 %s49, 1
        %s243 = scalar_lea.sflag [#allocation3], %s242
        %s244 = sand.u32 %s49, 1
        %s245 = smul.addr %s244, 24
        %s246 = scalar_lea.vmem [#allocation2], %s245
        // Predicated region
        $region25: #{tpu_custom_call.1} parent=23 // pred_check
          %p247 = pneg %p59
        $region26: #{tpu_custom_call.1} parent=23 // pred_check_branch
          %249 = sbr.rel (%p247) target = $region28
        $region27: #{tpu_custom_call.1} parent=23 // pred_region
          %s251 = ssub.s32 384, 384
          %252 = vsyncadd %s243, %s251
          %s253 = smul.addr %s15, 3
          %s254 = smul.addr %s253, 128
          %s255 = scalar_lea.hbm %s1, %s254
          %s257 = sshll.u32 %s246, 4
          %s258 = int_to_ptr.vmem [resolvable:$true] %s257
          %260 = dma.vmem_to_hbm [thread:$0]  %s258, 384, %s255, %s243
        $region28: #{tpu_custom_call.1} parent=23 // pred_fallthru
          _
      $region24: #{tpu_custom_call.1} parent=5 // pred_fallthru
        _
      %p261 = scmp.le.s32.totalorder 2, %s10
      // Predicated region
      $region29: #{tpu_custom_call.1} parent=5 // pred_check
        %p262 = pneg %p261
      $region30: #{tpu_custom_call.1} parent=5 // pred_check_branch
        %264 = sbr.rel (%p262) target = $region32
      $region31: #{tpu_custom_call.1} parent=5 // pred_region
        %s265 = ssub.s32 %s10, 2
        // Predicated region
        $region33: #{tpu_custom_call.1} parent=31 // pred_check
          %p266 = pneg %p65
        $region34: #{tpu_custom_call.1} parent=31 // pred_check_branch
          %268 = sbr.rel (%p266) target = $region36
        $region35: #{tpu_custom_call.1} parent=31 // pred_region
          %s269 = sand.u32 %s50, 1
          %s270 = scalar_lea.sflag [#allocation3], %s269
          %s271 = sand.u32 %s50, 1
          %s272 = smul.addr %s271, 24
          %s273 = scalar_lea.vmem [#allocation2], %s272
          %274 = dma.done %s270, 384
        $region36: #{tpu_custom_call.1} parent=31 // pred_fallthru
          _
      $region32: #{tpu_custom_call.1} parent=5 // pred_fallthru
        _
    $region6: #{tpu_custom_call.1} parent=1 // loop_footer
      %s14 = sadd.s32 1, %s10
    $region7: #{tpu_custom_call.1} parent=1 // loop_footer_branch
      %9 = sbr.rel target = $region3
    $region8: #{tpu_custom_call.1} parent=1 // loop_exit
      _
    %275 = vsyncpa [#allocation3], 1
    %s276 = scalar_lea.sflag [#allocation3], 1
    %277 = vsyncpa %s276, 1

</llo_original>
